<compile_context>
chip_gen: v6e
topology: v6e:2x2x1
jax: 0.10.0
libtpu: 0.0.40
codegen_flags: <defaults>
</compile_context>

<pallas_src>
import functools

import jax
import jax.numpy as jnp
from jax import lax
from jax.experimental import pallas as pl
from jax.experimental.pallas import tpu as pltpu


# --------------------------------------------------------------------------
# helpers
# --------------------------------------------------------------------------
def _hint_multiple(x, m: int):
    """pl.multiple_of, but a no-op on concrete Python ints (unrolled loops)."""
    if isinstance(x, int):
        return x
    return pl.multiple_of(x, m)


def _vmem_limit_bytes() -> int:
    """Generation-aware VMEM limit: ~3/4 of physical, capped at 100 MiB."""
    cap = 64 * 1024 * 1024
    try:
        info = pltpu.get_tpu_info()
        cap = int(getattr(info, "vmem_capacity_bytes", cap))
    except Exception:
        pass  # unknown device / older jax: keep conservative 64 MiB default
    return int(min((cap * 3) // 4, 100 * 1024 * 1024))


def _pick_row_block(b: int) -> int:
    """Anchor-row block: prefer 256 (v6e/v7x MXU rows), keep >= 2 blocks."""
    divisors = [c for c in (512, 256, 128, 64, 32, 16) if c < b and b % c == 0]
    for c in (256, 512, 128, 64, 32, 16):
        if c in divisors:
            return c
    return b


def _pick_col_block(b: int) -> int:
    """Contrast-column chunk for the in-kernel contraction loop."""
    for c in (512, 256, 128):
        if c < b and b % c == 0:
            return c
    return b


# --------------------------------------------------------------------------
# Pass 1: row-tiled L2 normalization with the temperature folded in.
# --------------------------------------------------------------------------
def _l2_normalize_kernel(x_ref, xn_ref, *, scale: float):
    # x_ref: (TR, D) input rows ; xn_ref: (TR, D) scaled normalized rows (bf16)
    x = x_ref[...].astype(jnp.float32)
    sq = jnp.sum(x * x, axis=-1, keepdims=True)              # (TR, 1)
    # 1/max(||x||,1e-12) == rsqrt(max(||x||^2,1e-24)); rsqrt runs on the EUP.
    inv = lax.rsqrt(jnp.maximum(sq, 1e-24)) * scale          # scale = sqrt(1/T)
    xn_ref[...] = (x * inv).astype(xn_ref.dtype)


# --------------------------------------------------------------------------
# Pass 2: per-row-block SimCLR loss, chunked contraction, masked num/den.
# --------------------------------------------------------------------------
def _simclr_loss_kernel(xn_ref, out_ref, *, tr: int, tc: int,
                        n_pairs: int, nrows: int):
    # xn_ref : (2N, D) scaled normalized features, VMEM-resident (bf16)
    # out_ref: (1, 8, 128) per-block partial sum of row losses (f32)
    r = pl.program_id(0)
    row_start = _hint_multiple(r * tr, tr)
    xr = xn_ref[pl.ds(row_start, tr), :]                      # (TR, D) anchors

    # Global row / positive-partner column ids (hoisted out of the loop).
    row_ids = row_start + lax.broadcasted_iota(jnp.int32, (tr, tc), 0)
    partner_ids = jnp.where(row_ids < n_pairs,
                            row_ids + n_pairs, row_ids - n_pairs)

    nchunks = nrows // tc

    def body(c, carry):
        num_acc, den_acc = carry
        col_start = _hint_multiple(c * tc, tc)
        xc = xn_ref[pl.ds(col_start, tc), :]                  # (TC, D) contrast
        # NT matmul on the MXU: contract last dims, f32 accumulation.
        logits = lax.dot_general(
            xr, xc,
            dimension_numbers=(((1,), (1,)), ((), ())),
            preferred_element_type=jnp.float32)               # (TR, TC)
        sim = jnp.exp(logits)                                  # T pre-folded
        col_ids = col_start + lax.broadcasted_iota(jnp.int32, (tr, tc), 1)
        self_mask = col_ids == row_ids                         # diagonal
        pos_mask = col_ids == partner_ids                      # positive pair
        # Numerator and denominator from the SAME sim values (exact exclusion
        # of the diagonal — no cancellation against a separately computed term).
        den_acc = den_acc + jnp.sum(jnp.where(self_mask, 0.0, sim),
                                    axis=-1, keepdims=True)
        num_acc = num_acc + jnp.sum(jnp.where(pos_mask, sim, 0.0),
                                    axis=-1, keepdims=True)
        return num_acc, den_acc

    zero = jnp.zeros((tr, 1), jnp.float32)
    num_acc, den_acc = lax.fori_loop(0, nchunks, body, (zero, zero),
                                     unroll=nchunks <= 8)

    loss_rows = jnp.log(den_acc) - jnp.log(num_acc)            # (TR, 1)
    # Per-block partial sum, lane-dense unmasked store.
    out_ref[...] = jnp.broadcast_to(jnp.sum(loss_rows), out_ref.shape)


def _build_pass2(b, d, tr, tc, n_pairs, nblocks, vmem_limit,
                 single_buffer_resident: bool):
    spec_kwargs = {}
    if single_buffer_resident:
        # Constant index_map -> the block never changes; double-buffering it
        # would only double its VMEM footprint (matters most on v7x, 64 MiB).
        spec_kwargs["pipeline_mode"] = pl.Buffered(1)
    kernel = functools.partial(_simclr_loss_kernel, tr=tr, tc=tc,
                               n_pairs=n_pairs, nrows=b)
    return pl.pallas_call(
        kernel,
        out_shape=jax.ShapeDtypeStruct((nblocks, 8, 128), jnp.float32),
        grid=(nblocks,),
        in_specs=[pl.BlockSpec((b, d), lambda r: (0, 0), **spec_kwargs)],
        out_specs=pl.BlockSpec((1, 8, 128), lambda r: (r, 0, 0)),
        compiler_params=pltpu.CompilerParams(
            dimension_semantics=("parallel",),
            vmem_limit_bytes=vmem_limit),
    )


# --------------------------------------------------------------------------
# Wrapper
# --------------------------------------------------------------------------
def simclr_loss(features: jax.Array, temperature: float = 0.07, *,
                matmul_dtype=jnp.bfloat16) -> jax.Array:
    """features: (2N, D) float. Returns scalar float32 SimCLR loss."""
    b, d = features.shape
    assert b % 2 == 0, "SimCLR expects an even batch (2N rows)"
    n_pairs = b // 2

    tr = _pick_row_block(b)
    tc = _pick_col_block(b)
    nblocks = b // tr
    vmem_limit = _vmem_limit_bytes()

    # ---- pass 1: L2 normalize, fold sqrt(1/T), store bf16 -----------------
    scale = float((1.0 / temperature) ** 0.5)
    xn = pl.pallas_call(
        functools.partial(_l2_normalize_kernel, scale=scale),
        out_shape=jax.ShapeDtypeStruct((b, d), matmul_dtype),
        grid=(nblocks,),
        in_specs=[pl.BlockSpec((tr, d), lambda r: (r, 0))],
        out_specs=pl.BlockSpec((tr, d), lambda r: (r, 0)),
        compiler_params=pltpu.CompilerParams(
            dimension_semantics=("parallel",),
            vmem_limit_bytes=vmem_limit),
    )(features)

    # ---- pass 2: tiled loss (single resident input stream) ----------------
    try:
        partial_sums = _build_pass2(b, d, tr, tc, n_pairs, nblocks,
                                    vmem_limit, True)(xn)
    except Exception:
        # Installed Pallas rejected pipeline_mode=Buffered(1); use default
        # (double-buffered) spec — identical semantics.
        partial_sums = _build_pass2(b, d, tr, tc, n_pairs, nblocks,
                                    vmem_limit, False)(xn)

    # Final mean: nblocks scalars of trivial plain-JAX glue.
    return jnp.sum(partial_sums[:, 0, 0]) / b


# --------------------------------------------------------------------------
# Pure-JAX f32 reference (mirrors the PyTorch forward) for sanity checking
# --------------------------------------------------------------------------
def _simclr_loss_ref(features, temperature=0.07):
    n = features.shape[0] // 2
    m = 2 * n
    norm = jnp.maximum(jnp.linalg.norm(features, axis=-1, keepdims=True), 1e-12)
    xn = features / norm
    sim = jnp.exp(xn @ xn.T / temperature)
    eye_m = jnp.eye(m)
    pos = jnp.tile(jnp.eye(n), (2, 2)) - eye_m
    neg = jnp.ones((m, m)) - eye_m
    num = jnp.sum(sim * pos, axis=-1)
    den = jnp.sum(sim * neg, axis=-1)
    return jnp.mean(-jnp.log(num / den))


if __name__ == "__main__":
    key = jax.random.PRNGKey(0)
    # 2N = 32 samples (N = 16 positive pairs), feature dim D = 128.
    features = jax.random.normal(key, (32, 128), dtype=jnp.float32)

    loss = jax.block_until_ready(simclr_loss(features, temperature=0.07))
    ref = jax.block_until_ready(_simclr_loss_ref(features, 0.07))

    # bf16 MXU operands shift each (already /T-scaled) logit by O(1e-2), so
    # compare against the f32 reference with a loose tolerance.
    assert bool(jnp.isfinite(loss)), loss
    assert jnp.allclose(loss, ref, rtol=5e-2, atol=5e-2), (loss, ref)

    print("KERNEL_OK")
</pallas_src>

<mosaic_0001>
module attributes {stable_mosaic.version = 11 : i64} {
  func.func @_l2_normalize_kernel(%arg0: i32, %arg1: memref<16x128xf32, #tpu.memory_space<vmem>>, %arg2: memref<16x128xbf16, #tpu.memory_space<vmem>>) attributes {dimension_semantics = [#tpu.dimension_semantics<parallel>], iteration_bounds = array<i64: 2>, scalar_prefetch = 0 : i64, scratch_operands = 0 : i64, tpu.core_type = #tpu.core_type<tc>, window_params = [{transform_indices = @transform_0, window_bounds = array<i64: 16, 128>}, {transform_indices = @transform_1, window_bounds = array<i64: 16, 128>}]} {
    %c0 = arith.constant 0 : index
    %c0_0 = arith.constant 0 : index
    %0 = vector.load %arg1[%c0, %c0_0] : memref<16x128xf32, #tpu.memory_space<vmem>>, vector<16x128xf32>
    %1 = arith.mulf %0, %0 : vector<16x128xf32>
    %cst = arith.constant dense<0.000000e+00> : vector<16xf32>
    %2 = vector.multi_reduction <add>, %1, %cst [1] : vector<16x128xf32> to vector<16xf32>
    %3 = vector.shape_cast %2 : vector<16xf32> to vector<16x1xf32>
    %cst_1 = arith.constant 1.000000e-24 : f32
    %4 = vector.broadcast %cst_1 : f32 to vector<16x1xf32>
    %5 = arith.maximumf %3, %4 : vector<16x1xf32>
    %6 = math.rsqrt %5 : vector<16x1xf32>
    %cst_2 = arith.constant 3.77964473 : f32
    %7 = vector.broadcast %cst_2 : f32 to vector<16x1xf32>
    %8 = arith.mulf %6, %7 : vector<16x1xf32>
    %9 = vector.broadcast %8 : vector<16x1xf32> to vector<16x128xf32>
    %10 = arith.mulf %0, %9 : vector<16x128xf32>
    %11 = arith.truncf %10 : vector<16x128xf32> to vector<16x128xbf16>
    %c0_3 = arith.constant 0 : index
    %c0_4 = arith.constant 0 : index
    %12 = vector.load %arg2[%c0_3, %c0_4] : memref<16x128xbf16, #tpu.memory_space<vmem>>, vector<16x128xbf16>
    tpu.vector_store %arg2[%c0_3, %c0_4], %11 {strides = array<i32>} : memref<16x128xbf16, #tpu.memory_space<vmem>>, vector<16x128xbf16>,
    return
  }
  func.func @transform_0(%arg0: i32) -> (i32, i32) {
    %c0_i32 = arith.constant 0 : i32
    %c0_i32_0 = arith.constant 0 : i32
    return %arg0, %c0_i32 : i32, i32
  }
  func.func @transform_1(%arg0: i32) -> (i32, i32) {
    %c0_i32 = arith.constant 0 : i32
    %c0_i32_0 = arith.constant 0 : i32
    return %arg0, %c0_i32 : i32, i32
  }
}

</mosaic_0001>

<llo_original>
// kernel: tpu_custom_call.1
$region0: #{tpu_custom_call.1}
  #allocation0 [shape = 'u32[]', space=smem, size = 0x4, offset = 0x4, fixed_abs, tag = 'smem constant byte address 0x4 - core index']
  #allocation1 [shape = 'u32[144,128]{1,0:T(1,128)}', space=vmem, size = 0x12000, scoped, tag = 'internal scratch']
  %s0 = inlined_call_operand.hbm [shape: f32[32,128], index: 0, kind: input, shape index: {}]
  %s1 = inlined_call_operand.hbm [shape: bf16[32,128], index: 1, kind: output, shape index: {}]
  %s2 = sld [smem:[#allocation0]]
  $region41: #{tpu_custom_call.1} parent=0
    _
  %s4 = ssub.s32 1, %s2
  %s5 = scalar_select 0, %s4, %s2
  $region1: #{tpu_custom_call.1} parent=0
    #allocation2 [shape = 'u8[16384]{0}', space=vmem, size = 0x4000, scoped, tag = 'input window, operand 0']
    #allocation3 [shape = 's32[2]{0}', space=sflag, size = 0x8, scoped, tag = 'scoped memory for tpu_custom_call.1']
    #allocation4 [shape = 's32[2]{0}', space=sflag, size = 0x8, scoped, tag = 'scoped memory for tpu_custom_call.1']
    #allocation5 [shape = 'u8[8192]{0}', space=vmem, size = 0x2000, scoped, tag = 'output window, operand 0']
    %6 = vsyncpa [#allocation3], 0
    %s7 = scalar_lea.sflag [#allocation3], 1
    %8 = vsyncpa %s7, 0
    %9 = vsyncpa [#allocation4], 0
    %s10 = scalar_lea.sflag [#allocation4], 1
    %11 = vsyncpa %s10, 0
    loop: start=0, step=1, limit=4
    $region2: #{tpu_custom_call.1} parent=1 // loop_pre_header
      _
    $region3: #{tpu_custom_call.1} parent=1 // loop_header
      %s13 = sphi 0, %s17
      %p14 = scmp.ge.s32.totalorder %s13, 4
      %s23 = sphi 0, %s25
      %s26 = sphi 0, %s23
      %s27 = sphi 0, %s26
      %s43 = sphi 0, %s27
      %s49 = sphi 0, %s51
      %s52 = sphi 0, %s49
      %s53 = sphi 0, %s52
      %s69 = sphi 0, %s53
    $region4: #{tpu_custom_call.1} parent=1 // loop_header_branch
      %16 = sbr.rel (%p14) target = $region8
    $region5: #{tpu_custom_call.1} parent=1 // loop_body
      %s18 = ssub.s32 %s13, 1
      %s19 = ssub.s32 %s13, 2
      %s20 = sadd.s32 %s13, 1
      %s21 = ssub.s32 %s13, %s20
      %p22 = scmp.eq.s32.totalorder %s21, 0
      %s24 = sadd.s32 %s23, 1
      %s25 = scalar_select %p22, %s23, %s24
      %p28 = pneg %p22
      %p29 = scmp.eq.s32.totalorder %s13, 1
      %p30 = por %p28, %p29
      %p31 = scmp.ne.s32.totalorder %s23, %s26
      %p32 = scmp.eq.s32.totalorder %s13, 0
      %p33 = por %p31, %p32
      %p34 = scmp.ne.s32.totalorder %s23, %s26
      %p35 = scmp.eq.s32.totalorder %s18, 1
      %p36 = por %p34, %p35
      %p37 = scmp.ne.s32.totalorder %s26, %s27
      %p38 = scmp.eq.s32.totalorder %s18, 0
      %p39 = por %p37, %p38
      %p40 = scmp.ne.s32.totalorder %s26, %s27
      %p41 = scmp.eq.s32.totalorder %s19, 1
      %p42 = por %p40, %p41
      %p44 = scmp.ne.s32.totalorder %s27, %s43
      %p45 = scmp.eq.s32.totalorder %s19, 0
      %p46 = por %p44, %p45
      %s47 = ssub.s32 %s13, %s20
      %p48 = scmp.eq.s32.totalorder %s47, 0
      %s50 = sadd.s32 %s49, 1
      %s51 = scalar_select %p48, %s49, %s50
      %p54 = pneg %p48
      %p55 = scmp.eq.s32.totalorder %s13, 1
      %p56 = por %p54, %p55
      %p57 = scmp.ne.s32.totalorder %s49, %s52
      %p58 = scmp.eq.s32.totalorder %s13, 0
      %p59 = por %p57, %p58
      %p60 = scmp.ne.s32.totalorder %s49, %s52
      %p61 = scmp.eq.s32.totalorder %s18, 1
      %p62 = por %p60, %p61
      %p63 = scmp.ne.s32.totalorder %s52, %s53
      %p64 = scmp.eq.s32.totalorder %s18, 0
      %p65 = por %p63, %p64
      %p66 = scmp.ne.s32.totalorder %s52, %s53
      %p67 = scmp.eq.s32.totalorder %s19, 1
      %p68 = por %p66, %p67
      %p70 = scmp.ne.s32.totalorder %s53, %s69
      %p71 = scmp.eq.s32.totalorder %s19, 0
      %p72 = por %p70, %p71
      %p73 = scmp.le.s32.totalorder 1, %s13
      %p74 = scmp.lt.s32.totalorder %s13, 3
      %p75 = pnand %p73, %p74
      %p76 = pneg %p75
      // Predicated region
      $region9: #{tpu_custom_call.1} parent=5 // pred_check
        _
      $region10: #{tpu_custom_call.1} parent=5 // pred_check_branch
        %78 = sbr.rel (%p75) target = $region12
      $region11: #{tpu_custom_call.1} parent=5 // pred_region
        %s79 = ssub.s32 %s13, 1
      $region12: #{tpu_custom_call.1} parent=5 // pred_fallthru
        _
      %p80 = scmp.lt.s32.totalorder %s13, 2
      // Predicated region
      $region13: #{tpu_custom_call.1} parent=5 // pred_check
        %p81 = pneg %p80
      $region14: #{tpu_custom_call.1} parent=5 // pred_check_branch
        %83 = sbr.rel (%p81) target = $region16
      $region15: #{tpu_custom_call.1} parent=5 // pred_region
        // Predicated region
        $region17: #{tpu_custom_call.1} parent=15 // pred_check
          %p84 = pneg %p33
        $region18: #{tpu_custom_call.1} parent=15 // pred_check_branch
          %86 = sbr.rel (%p84) target = $region20
        $region19: #{tpu_custom_call.1} parent=15 // pred_region
          %s87 = sand.u32 %s23, 1
          %s88 = scalar_lea.sflag [#allocation3], %s87
          %s89 = sand.u32 %s23, 1
          %s90 = smul.addr %s89, 16
          %s91 = scalar_lea.vmem [#allocation2], %s90
          %s92 = smul.u32 2, %s13
          %s94 = ssub.s32 256, 256
          %95 = vsyncadd %s88, %s94
          %s96 = smul.addr %s92, 128
          %s97 = scalar_lea.hbm %s0, %s96
          %s98 = sshll.u32 %s91, 4
          %s99 = int_to_ptr.vmem [resolvable:$true] %s98
          %104 = dma.hbm_to_vmem [thread:$0]  %s97, 256, %s99, %s88, 128, 128, 8
        $region20: #{tpu_custom_call.1} parent=15 // pred_fallthru
          _
      $region16: #{tpu_custom_call.1} parent=5 // pred_fallthru
        _
      %p105 = scmp.le.s32.totalorder 1, %s13
      %p106 = scmp.lt.s32.totalorder %s13, 3
      %p107 = pnand %p105, %p106
      %p108 = pneg %p107
      // Predicated region
      $region21: #{tpu_custom_call.1} parent=5 // pred_check
        _
      $region22: #{tpu_custom_call.1} parent=5 // pred_check_branch
        %110 = sbr.rel (%p107) target = $region24
      $region23: #{tpu_custom_call.1} parent=5 // pred_region
        %s111 = ssub.s32 %s13, 1
        %s112 = sand.u32 %s26, 1
        %s113 = scalar_lea.sflag [#allocation3], %s112
        %s114 = sand.u32 %s26, 1
        %s115 = smul.addr %s114, 16
        %s116 = scalar_lea.vmem [#allocation2], %s115
        // Predicated region
        $region25: #{tpu_custom_call.1} parent=23 // pred_check
          %p117 = pneg %p39
        $region26: #{tpu_custom_call.1} parent=23 // pred_check_branch
          %119 = sbr.rel (%p117) target = $region28
        $region27: #{tpu_custom_call.1} parent=23 // pred_region
          %120 = dma.done %s113, 256
        $region28: #{tpu_custom_call.1} parent=23 // pred_fallthru
          _
        %s121 = sand.u32 %s26, 1
        %s122 = scalar_lea.sflag [#allocation3], %s121
        %s123 = sand.u32 %s26, 1
        %s124 = smul.addr %s123, 16
        %s125 = scalar_lea.vmem [#allocation2], %s124
        %p126 = pneg %p39
        %p127 = pneg %p36
        %p128 = pneg %p65
        %p129 = pneg %p62
        %s130 = sand.u32 %s52, 1
        %s131 = scalar_lea.sflag [#allocation4], %s130
        %s132 = sand.u32 %s52, 1
        %s133 = smul.addr %s132, 8
        %s134 = scalar_lea.vmem [#allocation5], %s133
        %s135 = smul.u32 2, %s18
        %s136 = smul.u32 2, %s18
        %v137 = vld [vmem:[%s116] sm:$0xff]
        %v138 = vld [vmem:[%s116 + $0x8] sm:$0xff]
        %v139 = vmul.f32 %v137, %v137
        %v140 = vmul.f32 %v138, %v138
        %141 = vadd.xlane.f32.xlu0 %v139
        %v142 = vpop.xlane.xlu0 %141
        %143 = vadd.xlane.f32.xlu0 %v140
        %v144 = vpop.xlane.xlu0 %143
        %v145 = vmax.f32 %v142, 1e-24
        %v146 = vmax.f32 %v144, 1e-24
        %v147 = vrsqrt.pop %v145
        %v148 = vrsqrt.pop %v146
        %v149 = vmul.f32 %v147, 3.7796447
        %v150 = vmul.f32 %v148, 3.7796447
        %v151 = vmul.f32 %v137, %v149
        %v152 = vmul.f32 %v138, %v150
        %v153 = vpack.c.bf16 %v152, %v151
        %v155 = vunpack.c.l.b16 %v153
        %v156 = vunpack.c.h.b16 %v153
        %v157 = vpack.c.b16 %v155, %v155
        %v158 = vpack.c.b16 %v156, %v156
        %161 = vst [vmem:[%s134] sm:$0xf] %v157
        %162 = vst [vmem:[%s134 + $0x4] sm:$0xf] %v158
        %s163 = sand.u32 %s52, 1
        %s164 = scalar_lea.sflag [#allocation4], %s163
        %s165 = sand.u32 %s52, 1
        %s166 = smul.addr %s165, 8
        %s167 = scalar_lea.vmem [#allocation5], %s166
        // Predicated region
        $region29: #{tpu_custom_call.1} parent=23 // pred_check
          %p168 = pneg %p62
        $region30: #{tpu_custom_call.1} parent=23 // pred_check_branch
          %170 = sbr.rel (%p168) target = $region32
        $region31: #{tpu_custom_call.1} parent=23 // pred_region
          %s171 = smul.u32 2, %s18
          %s173 = ssub.s32 128, 128
          %174 = vsyncadd %s164, %s173
          %s175 = smul.addr %s171, 64
          %s176 = scalar_lea.hbm %s1, %s175
          %s177 = sshll.u32 %s167, 4
          %s178 = int_to_ptr.vmem [resolvable:$true] %s177
          %183 = dma.vmem_to_hbm [thread:$0]  %s178, 128, %s176, %s164, 64, 64, 4
        $region32: #{tpu_custom_call.1} parent=23 // pred_fallthru
          _
      $region24: #{tpu_custom_call.1} parent=5 // pred_fallthru
        _
      %p184 = scmp.le.s32.totalorder 2, %s13
      // Predicated region
      $region33: #{tpu_custom_call.1} parent=5 // pred_check
        %p185 = pneg %p184
      $region34: #{tpu_custom_call.1} parent=5 // pred_check_branch
        %187 = sbr.rel (%p185) target = $region36
      $region35: #{tpu_custom_call.1} parent=5 // pred_region
        %s188 = ssub.s32 %s13, 2
        // Predicated region
        $region37: #{tpu_custom_call.1} parent=35 // pred_check
          %p189 = pneg %p68
        $region38: #{tpu_custom_call.1} parent=35 // pred_check_branch
          %191 = sbr.rel (%p189) target = $region40
        $region39: #{tpu_custom_call.1} parent=35 // pred_region
          %s192 = sand.u32 %s53, 1
          %s193 = scalar_lea.sflag [#allocation4], %s192
          %s194 = sand.u32 %s53, 1
          %s195 = smul.addr %s194, 8
          %s196 = scalar_lea.vmem [#allocation5], %s195
          %197 = dma.done %s193, 128
        $region40: #{tpu_custom_call.1} parent=35 // pred_fallthru
          _
      $region36: #{tpu_custom_call.1} parent=5 // pred_fallthru
        _
    $region6: #{tpu_custom_call.1} parent=1 // loop_footer
      %s17 = sadd.s32 1, %s13
    $region7: #{tpu_custom_call.1} parent=1 // loop_footer_branch
      %12 = sbr.rel target = $region3
    $region8: #{tpu_custom_call.1} parent=1 // loop_exit
      _
    %198 = vsyncpa [#allocation3], 1
    %s199 = scalar_lea.sflag [#allocation3], 1
    %200 = vsyncpa %s199, 1
    %201 = vsyncpa [#allocation4], 1
    %s202 = scalar_lea.sflag [#allocation4], 1
    %203 = vsyncpa %s202, 1

</llo_original>
